<compile_context>
chip_gen: v7x
topology: tpu7x:2x2x1
jax: 0.10.0
libtpu: 0.0.40
codegen_flags: <defaults>
</compile_context>

<pallas_src>
import jax
import jax.numpy as jnp
from jax.experimental import pallas as pl
from jax.experimental.pallas import tpu as pltpu


def _round_up(a: int, m: int) -> int:
    return (a + m - 1) // m * m


def _round_dn(a: int, m: int) -> int:
    return a // m * m


_VMEM_TILE_BUDGET = 32 << 20     # bytes reserved for double-buffered row tiles
_VMEM_LIMIT_CAP = 48 << 20       # stay well below v7x's 64 MiB physical VMEM


def _pick_rows(total_rows: int, bytes_per_row: int, *, min_tiles: int = 2,
               cap: int | None = None) -> int:
    """Rows per tile: as big as the VMEM budget allows, >= min_tiles tiles when
    the batch permits (v7x has 2 TCs), multiple of 8 unless full-extent."""
    tb = max(8, _VMEM_TILE_BUDGET // (2 * max(1, bytes_per_row)))
    if cap is not None:
        tb = min(tb, max(1, cap))
    if total_rows >= 8 * min_tiles:
        tb = min(tb, _round_up(pl.cdiv(total_rows, min_tiles), 8))
    if tb >= total_rows:
        return total_rows                      # single full-extent block
    return max(8, _round_dn(tb, 8))


# ---------------------------------------------------------------------------
# Kernels
# ---------------------------------------------------------------------------

def _packed_kernel(x_ref, w_ref, b_ref, o_ref):
    # x_ref: (tbp, 128)  tile of x viewed as (batch // p, p * F = 128)
    # w_ref: (128, p)    block-diagonal weight, resident across grid steps
    # b_ref: (1,) f32    bias in SMEM
    # o_ref: (tbp, p)
    acc = jnp.dot(x_ref[...], w_ref[...], preferred_element_type=jnp.float32)
    o_ref[...] = (acc + b_ref[0]).astype(o_ref.dtype)


def _general_kernel(x_ref, w_ref, b_ref, o_ref):
    # x_ref: (tb, F); w_ref: (1, F); b_ref: (1,) SMEM; o_ref: (tb, 1)
    x = x_ref[...].astype(jnp.float32)
    w = w_ref[...].astype(jnp.float32)
    row = jnp.sum(x * w, axis=-1, keepdims=True)        # VPU mul + XLU reduce
    o_ref[...] = (row + b_ref[0]).astype(o_ref.dtype)   # sublane-major store


# ---------------------------------------------------------------------------
# Wrappers
# ---------------------------------------------------------------------------

def _packed_call(x, weight, bias, p, cost, tile_rows):
    batch, num_inputs = x.shape
    itemsize = jnp.dtype(x.dtype).itemsize
    rows = batch // p
    x_view = x.reshape(rows, 128)                # free row-major reshape

    # (128, p) block-diagonal weight: w_bd[j*F + f, j] = weight[0, f]
    w_bd = (weight[0][None, :, None]
            * jnp.eye(p, dtype=weight.dtype)[:, None, :]
            ).reshape(128, p).astype(x.dtype)

    # Per physical row, double-buffered: 128-lane input + lane-padded output.
    bytes_per_row = 128 * itemsize + 128 * itemsize
    tbp = _pick_rows(rows, bytes_per_row, cap=tile_rows)
    num_tiles = pl.cdiv(rows, tbp)

    tbp_pad = _round_up(tbp, 8)
    vmem_need = (2 * tbp_pad * 128 * itemsize        # x double buffers
                 + 2 * tbp_pad * 128 * itemsize      # out double buffers (lane-padded)
                 + 2 * 128 * 128 * itemsize)         # resident weight (+ dbl buf)
    vmem_limit = int(min(max(vmem_need + (4 << 20), 16 << 20), _VMEM_LIMIT_CAP))

    out = pl.pallas_call(
        _packed_kernel,
        out_shape=jax.ShapeDtypeStruct((rows, p), x.dtype),
        grid_spec=pltpu.PrefetchScalarGridSpec(
            num_scalar_prefetch=0,
            grid=(num_tiles,),
            in_specs=[
                pl.BlockSpec((tbp, 128), lambda i: (i, 0)),       # x tile
                pl.BlockSpec((128, p), lambda i: (0, 0)),         # resident weight
                pl.BlockSpec(memory_space=pltpu.MemorySpace.SMEM),  # bias scalar
            ],
            out_specs=pl.BlockSpec((tbp, p), lambda i: (i, 0)),
        ),
        compiler_params=pltpu.CompilerParams(
            dimension_semantics=("parallel",),
            vmem_limit_bytes=vmem_limit,
        ),
        cost_estimate=cost,
    )(x_view, w_bd, bias)

    return out.reshape(batch, 1)


def _general_call(x, weight, bias, cost, tile_rows):
    batch, num_inputs = x.shape
    itemsize = jnp.dtype(x.dtype).itemsize
    f_pad = _round_up(num_inputs, 128)
    w = weight.astype(x.dtype)

    bytes_per_row = f_pad * itemsize + 128 * 4       # input row + lane-padded out row
    tb = _pick_rows(batch, bytes_per_row, cap=tile_rows)
    num_tiles = pl.cdiv(batch, tb)

    tb_pad = _round_up(tb, 8)
    vmem_need = (2 * tb_pad * f_pad * itemsize       # x double buffers
                 + 2 * tb_pad * 128 * itemsize       # out double buffers (lane-padded)
                 + 2 * 8 * f_pad * itemsize)         # weight (sublane-padded, dbl buf)
    vmem_limit = int(min(max(vmem_need + (4 << 20), 16 << 20), _VMEM_LIMIT_CAP))

    # TODO(synk): for very large num_inputs add a second ("arbitrary") grid axis
    # over the feature dim with a VMEM f32 accumulator instead of shrinking tb.
    out = pl.pallas_call(
        _general_kernel,
        out_shape=jax.ShapeDtypeStruct((batch, 1), x.dtype),
        grid_spec=pltpu.PrefetchScalarGridSpec(
            num_scalar_prefetch=0,
            grid=(num_tiles,),
            in_specs=[
                pl.BlockSpec((tb, num_inputs), lambda i: (i, 0)),   # x tile
                pl.BlockSpec((1, num_inputs), lambda i: (0, 0)),    # resident weight
                pl.BlockSpec(memory_space=pltpu.MemorySpace.SMEM),  # bias scalar
            ],
            out_specs=pl.BlockSpec((tb, 1), lambda i: (i, 0)),
        ),
        compiler_params=pltpu.CompilerParams(
            dimension_semantics=("parallel",),
            vmem_limit_bytes=vmem_limit,
        ),
        cost_estimate=cost,
    )(x, w, bias)
    return out


def value_branch(x, weight, bias, *, tile_rows=None):
    """Equivalent of PyTorch ValueBranch: nn.Linear(num_inputs, 1)(x).

    Args:
      x:      (batch, num_inputs)
      weight: (1, num_inputs)   (PyTorch Linear weight layout)
      bias:   (1,)
      tile_rows: optional cap on rows-per-tile (testing / tuning).
    Returns:
      (batch, 1), dtype of x.
    """
    batch, num_inputs = x.shape
    assert weight.shape == (1, num_inputs)
    itemsize = jnp.dtype(x.dtype).itemsize
    b = bias.reshape(1).astype(jnp.float32)

    cost = pl.CostEstimate(
        flops=2 * batch * num_inputs,
        transcendentals=0,
        bytes_accessed=batch * num_inputs * itemsize
        + batch * itemsize
        + num_inputs * itemsize,
    )

    # Packed MXU path when F divides 128 and the batch packs evenly.
    if num_inputs <= 128 and 128 % num_inputs == 0:
        p = 128 // num_inputs
        if batch % p == 0:
            return _packed_call(x, weight, b, p, cost, tile_rows)
    return _general_call(x, weight, b, cost, tile_rows)


if __name__ == "__main__":
    key = jax.random.PRNGKey(0)
    k_x, k_w, k_b, k_x2, k_x3 = jax.random.split(key, 5)

    # --- Primary case: the actual ValueBranch shapes (small F, packed MXU path).
    num_inputs = 32
    batch = 8
    bound = 1.0 / (num_inputs ** 0.5)
    weight = jax.random.uniform(k_w, (1, num_inputs), jnp.float32, -bound, bound)
    bias = jax.random.uniform(k_b, (1,), jnp.float32, -bound, bound)
    x = jax.random.normal(k_x, (batch, num_inputs), jnp.float32)

    out = jax.block_until_ready(value_branch(x, weight, bias))
    ref = x @ weight.T + bias
    assert out.shape == (batch, 1)
    assert jnp.allclose(out, ref, atol=1e-5, rtol=1e-5)

    # --- Packed path with multiple tiles + ragged last tile (rows=11, tiles 8+3).
    x2 = jax.random.normal(k_x2, (44, num_inputs), jnp.float32)
    out2 = jax.block_until_ready(value_branch(x2, weight, bias, tile_rows=8))
    ref2 = x2 @ weight.T + bias
    assert jnp.allclose(out2, ref2, atol=1e-5, rtol=1e-5)

    # --- General (non-packing F) path with a ragged last batch tile.
    num_inputs3, batch3 = 48, 20            # 128 % 48 != 0 -> VPU/XLU fallback
    bound3 = 1.0 / (num_inputs3 ** 0.5)
    weight3 = jax.random.uniform(k_w, (1, num_inputs3), jnp.float32, -bound3, bound3)
    x3 = jax.random.normal(k_x3, (batch3, num_inputs3), jnp.float32)
    out3 = jax.block_until_ready(value_branch(x3, weight3, bias, tile_rows=8))
    ref3 = x3 @ weight3.T + bias
    assert jnp.allclose(out3, ref3, atol=1e-5, rtol=1e-5)

    print("KERNEL_OK")
</pallas_src>

<mosaic_0001>
module attributes {stable_mosaic.version = 11 : i64} {
  func.func @_packed_kernel(%arg0: i32, %arg1: memref<2x128xf32, #tpu.memory_space<vmem>>, %arg2: memref<128x4xf32, #tpu.memory_space<vmem>>, %arg3: memref<1xf32, #tpu.memory_space<smem>>, %arg4: memref<2x4xf32, #tpu.memory_space<vmem>>) attributes {dimension_semantics = [#tpu.dimension_semantics<parallel>], iteration_bounds = array<i64: 1>, scalar_prefetch = 0 : i64, scratch_operands = 0 : i64, tpu.core_type = #tpu.core_type<tc>, window_params = [{transform_indices = @transform_0, window_bounds = array<i64: 2, 128>}, {pipeline_mode = #tpu.pipeline_mode<synchronous>, transform_indices = @transform_1, window_bounds = array<i64: 128, 4>}, {transform_indices = @transform_2, window_bounds = array<i64: 1>}, {transform_indices = @transform_3, window_bounds = array<i64: 2, 4>}]} {
    %c0 = arith.constant 0 : index
    %c0_0 = arith.constant 0 : index
    %0 = vector.load %arg1[%c0, %c0_0] : memref<2x128xf32, #tpu.memory_space<vmem>>, vector<2x128xf32>
    %c0_1 = arith.constant 0 : index
    %c0_2 = arith.constant 0 : index
    %1 = vector.load %arg2[%c0_1, %c0_2] : memref<128x4xf32, #tpu.memory_space<vmem>>, vector<128x4xf32>
    %cst = arith.constant dense<0.000000e+00> : vector<2x4xf32>
    %2 = tpu.matmul %0, %1, %cst {dimension_numbers = #tpu.dot_dimension_numbers<[1], [0], [0], [1], [0, 0, 1, 1], [], []>} : vector<2x128xf32>, vector<128x4xf32>, vector<2x4xf32> -> vector<2x4xf32>
    %c0_3 = arith.constant 0 : index
    %3 = memref.load %arg3[%c0_3] : memref<1xf32, #tpu.memory_space<smem>>
    %4 = vector.broadcast %3 : f32 to vector<2x4xf32>
    %5 = arith.addf %2, %4 : vector<2x4xf32>
    %c0_4 = arith.constant 0 : index
    %c0_5 = arith.constant 0 : index
    %6 = vector.load %arg4[%c0_4, %c0_5] : memref<2x4xf32, #tpu.memory_space<vmem>>, vector<2x4xf32>
    tpu.vector_store %arg4[%c0_4, %c0_5], %5 {strides = array<i32>} : memref<2x4xf32, #tpu.memory_space<vmem>>, vector<2x4xf32>,
    return
  }
  func.func @transform_0(%arg0: i32) -> (i32, i32) {
    %c0_i32 = arith.constant 0 : i32
    %c0_i32_0 = arith.constant 0 : i32
    return %arg0, %c0_i32 : i32, i32
  }
  func.func @transform_1(%arg0: i32) -> (i32, i32) {
    %c0_i32 = arith.constant 0 : i32
    %c0_i32_0 = arith.constant 0 : i32
    %c0_i32_1 = arith.constant 0 : i32
    return %c0_i32, %c0_i32_0 : i32, i32
  }
  func.func @transform_2(%arg0: i32) -> i32 {
    %c0_i32 = arith.constant 0 : i32
    %c0_i32_0 = arith.constant 0 : i32
    return %c0_i32 : i32
  }
  func.func @transform_3(%arg0: i32) -> (i32, i32) {
    %c0_i32 = arith.constant 0 : i32
    %c0_i32_0 = arith.constant 0 : i32
    return %arg0, %c0_i32 : i32, i32
  }
}

</mosaic_0001>

<llo_original>
// kernel: tpu_custom_call.1
$region0: #{tpu_custom_call.1}
  #allocation0 [shape = 'u32[]', space=smem, size = 0x4, offset = 0x4, fixed_abs, tag = 'smem constant byte address 0x4 - core index']
  #allocation1 [shape = 'u32[144,128]{1,0:T(1,128)}', space=vmem, size = 0x12000, scoped, tag = 'internal scratch']
  #allocation2 [shape = 'f32[1]{0:T(128)S(6)}', space=smem, size = 0x200, scoped, tag = 'scoped memory for tpu_custom_call.1']
  %s0 = inlined_call_operand.vmem [shape: f32[2,128], index: 0, kind: input, shape index: {}]
  %s1 = inlined_call_operand.vmem [shape: f32[128,4], index: 1, kind: input, shape index: {}]
  %s2 = inlined_call_operand.<no memory space> [shape: f32[1], index: 2, kind: input, shape index: {}]
  %s3 = inlined_call_operand.hbm [shape: f32[2,4], index: 3, kind: output, shape index: {}]
  %s4 = sld [smem:[#allocation0]]
  $region22: #{tpu_custom_call.1} parent=0
    _
  %s6 = ssub.s32 1, %s4
  %s7 = scalar_select 0, %s6, %s4
  %8 = sst [smem:[#allocation2]] %s2
  $region1: #{tpu_custom_call.1} parent=0
    #allocation3 [shape = 'u8[1024]{0}', space=vmem, size = 0x400, scoped, tag = 'output window, operand 0, single buffered']
    #allocation4 [shape = 's32[1]{0}', space=sflag, size = 0x4, scoped, tag = 'scoped memory for tpu_custom_call.1']
    %9 = vsyncpa [#allocation4], 0
    // Predicated region
    $region2: #{tpu_custom_call.1} parent=1 // pred_check
      _
    $region3: #{tpu_custom_call.1} parent=1 // pred_check_branch
      %11 = sbr.rel (0) target = $region5
    $region4: #{tpu_custom_call.1} parent=1 // pred_region
      _
    $region5: #{tpu_custom_call.1} parent=1 // pred_fallthru
      _
    // Predicated region
    $region6: #{tpu_custom_call.1} parent=1 // pred_check
      _
    $region7: #{tpu_custom_call.1} parent=1 // pred_check_branch
      %13 = sbr.rel (0) target = $region9
    $region8: #{tpu_custom_call.1} parent=1 // pred_region
      _
    $region9: #{tpu_custom_call.1} parent=1 // pred_fallthru
      _
    // Predicated region
    $region10: #{tpu_custom_call.1} parent=1 // pred_check
      _
    $region11: #{tpu_custom_call.1} parent=1 // pred_check_branch
      %15 = sbr.rel (0) target = $region13
    $region12: #{tpu_custom_call.1} parent=1 // pred_region
      _
    $region13: #{tpu_custom_call.1} parent=1 // pred_fallthru
      _
    %v16 = vld [vmem:[%s0] sm:$0x3]
    %v17 = vld [vmem:[%s1] sm:$0xff]
    %v18 = vld [vmem:[%s1 + $0x8] sm:$0xff]
    %v19 = vld [vmem:[%s1 + $0x10] sm:$0xff]
    %v20 = vld [vmem:[%s1 + $0x18] sm:$0xff]
    %v21 = vld [vmem:[%s1 + $0x20] sm:$0xff]
    %v22 = vld [vmem:[%s1 + $0x28] sm:$0xff]
    %v23 = vld [vmem:[%s1 + $0x30] sm:$0xff]
    %v24 = vld [vmem:[%s1 + $0x38] sm:$0xff]
    %v25 = vld [vmem:[%s1 + $0x40] sm:$0xff]
    %v26 = vld [vmem:[%s1 + $0x48] sm:$0xff]
    %v27 = vld [vmem:[%s1 + $0x50] sm:$0xff]
    %v28 = vld [vmem:[%s1 + $0x58] sm:$0xff]
    %v29 = vld [vmem:[%s1 + $0x60] sm:$0xff]
    %v30 = vld [vmem:[%s1 + $0x68] sm:$0xff]
    %v31 = vld [vmem:[%s1 + $0x70] sm:$0xff]
    %v32 = vld [vmem:[%s1 + $0x78] sm:$0xff]
    %s33 = sld [smem:[#allocation2]]
    %v34 = vstv %s33
    %35 = vmatprep.subr.mxu0 0.0
    %36 = vmatpush1.msra.mxu0 %v17
    %37 = vmatprep.subr.mxu0 0.0
    %38 = vmatpush1.msra.mxu0 %v18
    %39 = vmatprep.subr.mxu0 0.0
    %40 = vmatpush1.msra.mxu0 %v19
    %41 = vmatprep.subr.mxu0 0.0
    %42 = vmatpush1.msra.mxu0 %v20
    %43 = vmatprep.subr.mxu0 0.0
    %44 = vmatpush1.msra.mxu0 %v21
    %45 = vmatprep.subr.mxu0 0.0
    %46 = vmatpush1.msra.mxu0 %v22
    %47 = vmatprep.subr.mxu0 0.0
    %48 = vmatpush1.msra.mxu0 %v23
    %49 = vmatprep.subr.mxu0 0.0
    %50 = vmatpush1.msra.mxu0 %v24
    %51 = vmatprep.subr.mxu0 0.0
    %52 = vmatpush1.msra.mxu0 %v25
    %53 = vmatprep.subr.mxu0 0.0
    %54 = vmatpush1.msra.mxu0 %v26
    %55 = vmatprep.subr.mxu0 0.0
    %56 = vmatpush1.msra.mxu0 %v27
    %57 = vmatprep.subr.mxu0 0.0
    %58 = vmatpush1.msra.mxu0 %v28
    %59 = vmatprep.subr.mxu0 0.0
    %60 = vmatpush1.msra.mxu0 %v29
    %61 = vmatprep.subr.mxu0 0.0
    %62 = vmatpush1.msra.mxu0 %v30
    %63 = vmatprep.subr.mxu0 0.0
    %64 = vmatpush1.msra.mxu0 %v31
    %65 = vmatprep.subr.mxu0 0.0
    %66 = vmatpush1.msra.mxu0 %v32
    %67 = vmatprep.subr.mxu0 0.0
    %68 = vmatpush1.msra.mxu0 0.0
    %69 = vmatprep.subr.mxu0 0.0
    %70 = vmatpush1.msra.mxu0 0.0
    %71 = vmatprep.subr.mxu0 0.0
    %72 = vmatpush1.msra.mxu0 0.0
    %73 = vmatprep.subr.mxu0 0.0
    %74 = vmatpush1.msra.mxu0 0.0
    %75 = vmatprep.subr.mxu0 0.0
    %76 = vmatpush1.msra.mxu0 0.0
    %77 = vmatprep.subr.mxu0 0.0
    %78 = vmatpush1.msra.mxu0 0.0
    %79 = vmatprep.subr.mxu0 0.0
    %80 = vmatpush1.msra.mxu0 0.0
    %81 = vmatprep.subr.mxu0 0.0
    %82 = vmatpush1.msra.mxu0 0.0
    %83 = vmatprep.subr.mxu0 0.0
    %84 = vmatpush1.msra.mxu0 0.0
    %85 = vmatprep.subr.mxu0 0.0
    %86 = vmatpush1.msra.mxu0 0.0
    %87 = vmatprep.subr.mxu0 0.0
    %88 = vmatpush1.msra.mxu0 0.0
    %89 = vmatprep.subr.mxu0 0.0
    %90 = vmatpush1.msra.mxu0 0.0
    %91 = vmatprep.subr.mxu0 0.0
    %92 = vmatpush1.msra.mxu0 0.0
    %93 = vmatprep.subr.mxu0 0.0
    %94 = vmatpush1.msra.mxu0 0.0
    %95 = vmatprep.subr.mxu0 0.0
    %96 = vmatpush1.msra.mxu0 0.0
    %97 = vmatprep.subr.mxu0 0.0
    %98 = vmatpush1.msra.mxu0 0.0
    %99 = vmatprep.mubr.f32.mxu0 0.0
    %100 = vmatmul.mubr.f32.gmra.mrb[0].mxu0 %v16
    %v101 = vpop.f32.mrb[0].mxu0
    %v102 = vadd.f32 %v34, %v101
    %v103 = vpop.f32.mrb[0].mxu0
    %104 = vdwg.mxu0
    %vm105 = vcmask 25600
    %106 = vst.msk [vmem:[#allocation3] sm:$0x3] %vm105, %v102
    // Predicated region
    $region14: #{tpu_custom_call.1} parent=1 // pred_check
      _
    $region15: #{tpu_custom_call.1} parent=1 // pred_check_branch
      %108 = sbr.rel (0) target = $region17
    $region16: #{tpu_custom_call.1} parent=1 // pred_region
      %s110 = ssub.s32 32, 32
      %111 = vsyncadd [#allocation4], %s110
      %s113 = sshll.u32 [#allocation3], 4
      %s114 = int_to_ptr.vmem [resolvable:$true] %s113
      %116 = dma.vmem_to_hbm [thread:$0]  %s114, 32, %s3, [#allocation4]
    $region17: #{tpu_custom_call.1} parent=1 // pred_fallthru
      _
    // Predicated region
    $region18: #{tpu_custom_call.1} parent=1 // pred_check
      _
    $region19: #{tpu_custom_call.1} parent=1 // pred_check_branch
      %118 = sbr.rel (0) target = $region21
    $region20: #{tpu_custom_call.1} parent=1 // pred_region
      %119 = dma.done [#allocation4], 32
    $region21: #{tpu_custom_call.1} parent=1 // pred_fallthru
      _
    %120 = vsyncpa [#allocation4], 1

</llo_original>
